<compile_context>
chip_gen: v7x
topology: tpu7x:2x2x1
jax: 0.10.0
libtpu: 0.0.40
codegen_flags: <defaults>
</compile_context>

<pallas_src>
import math

import jax
import jax.numpy as jnp
from jax.experimental import pallas as pl
from jax.experimental.pallas import tpu as pltpu


def _round_up(x, m):
    return (x + m - 1) // m * m


def _cdiv(a, b):
    return -(-a // b)


def _edge_attention_kernel(ht_ref, hs_ref, wf_ref, brow_ref,
                           group_ref, expand_ref, fold_ref,
                           wv_ref, attn_ref):
    """One batch tile of EdgeAttention.

    ht_ref    : (TB, H)      temporal edge hidden state (bf16)
    hs_ref    : (TB, E*H)    spatial edge hidden states, edges flat on lanes (bf16)
    wf_ref    : (H, E*H)     fused (temporal∘spatial) weight, temperature folded in (bf16)
    brow_ref  : (1, E*H)     fused bias row, temperature folded in (f32)
    group_ref : (E*H, E)     lane-group sum matrix (block column of ones, f32)
    expand_ref: (E, E*H)     group matrix transposed (broadcast attn to lanes, f32)
    fold_ref  : (E*H, H)     stacked identities (fold edge groups back to H, f32)
    wv_ref    : (TB, H)      out: attention-weighted spatial value
    attn_ref  : (TB, E)      out: softmax attention weights
    """
    ht = ht_ref[...]                                   # (TB, H)    bf16
    hs_f = hs_ref[...].astype(jnp.float32)             # (TB, E*H)  upcast once

    # Fused projection: proj[b, e*H + h] = temperature * (Linear_t(ht)[b,:] @ Ws)[h]
    proj = (jnp.dot(ht, wf_ref[...], preferred_element_type=jnp.float32)
            + brow_ref[...])                           # (TB, E*H)  MXU

    # logits[b, e] = temperature * sum_h hs[b,e,h] * proj[b,h]
    # (the spatial-bias term temporal·bs is constant over e -> cancels in softmax)
    prod = hs_f * proj                                 # (TB, E*H)  VPU
    logits = jnp.dot(prod, group_ref[...],
                     preferred_element_type=jnp.float32)   # (TB, E)  MXU

    # softmax over edges (exact normalization so weights sum to 1)
    m = jnp.max(logits, axis=-1, keepdims=True)
    p = jnp.exp(logits - m)
    attn = p / jnp.sum(p, axis=-1, keepdims=True)      # (TB, E)

    # weighted_value[b, h] = sum_e attn[b, e] * hs[b, e, h]
    attn_exp = jnp.dot(attn, expand_ref[...],
                       preferred_element_type=jnp.float32)  # (TB, E*H) MXU
    wv = jnp.dot(attn_exp * hs_f, fold_ref[...],
                 preferred_element_type=jnp.float32)        # (TB, H)   MXU

    wv_ref[...] = wv.astype(wv_ref.dtype)
    attn_ref[...] = attn.astype(attn_ref.dtype)


def edge_attention(h_temporal, h_spatials,
                   w_temporal, b_temporal, w_spatial, b_spatial,
                   *, block_b=1024, stream_dtype=jnp.bfloat16):
    """Pallas implementation of EdgeAttention.forward (num_attention_head=1).

    h_temporal : (seq_len, nenv, 1, H)
    h_spatials : (seq_len, nenv, num_edges, H)
    w_temporal, w_spatial : (A, H)   (PyTorch nn.Linear weight layout)
    b_temporal, b_spatial : (A,)
    returns (weighted_value (seq, nenv, 1, H), attn (seq*nenv, human_num, 1))
    """
    seq_len, nenv, agent_num, h_size = h_temporal.shape
    assert agent_num == 1, "module hardcodes agent_num = 1"
    num_edges = h_spatials.shape[2]
    human_num = num_edges // agent_num
    a_size = w_temporal.shape[0]
    eh = num_edges * h_size
    batch = seq_len * nenv * agent_num

    # Lane-dense, contiguous flattening of the dominant inputs; bf16 stream
    # halves HBM bytes on this memory-bound kernel.
    ht = h_temporal.reshape(batch, h_size).astype(stream_dtype)
    hs = h_spatials.reshape(batch, eh).astype(stream_dtype)

    # Batch tile: large (amortizes per-grid-step overhead, long contiguous
    # DMAs), but guarantee >= 2 grid steps when there is enough work so the
    # "parallel" axis can shard across v7x's two TensorCores.  No padding:
    # Pallas handles the partial last block (OOB rows dropped on store).
    block = max(8, min(_round_up(block_b, 8), _round_up(_cdiv(batch, 2), 8)))
    num_blocks = _cdiv(batch, block)

    # --- Weight / constant prep (tiny, done once in the wrapper) ------------
    temperature = float(num_edges) / math.sqrt(a_size)
    wt_t = jnp.transpose(w_temporal).astype(jnp.float32)                # (H, A)
    ws_tiled = jnp.tile(w_spatial.astype(jnp.float32), (1, num_edges))  # (A, E*H)

    # Fuse temporal Linear into the spatial projection and fold temperature in:
    #   proj = (ht @ Wt^T + bt) @ tile(Ws) * temp = ht @ W_fused + b_row
    w_fused = (wt_t @ ws_tiled) * temperature                           # (H, E*H)
    b_row = (b_temporal.reshape(1, a_size).astype(jnp.float32)
             @ ws_tiled) * temperature                                  # (1, E*H)
    # The spatial bias term (temporal · bs) is identical for every edge and
    # therefore cancels exactly in the softmax -> dropped.

    w_fused = w_fused.astype(stream_dtype)      # matmul partner of bf16 ht
    b_row = b_row.astype(jnp.float32)           # added to f32 accumulator

    group = jnp.repeat(jnp.eye(num_edges, dtype=jnp.float32),
                       h_size, axis=0)                                  # (E*H, E)
    expand = group.T                                                    # (E, E*H)
    fold = jnp.tile(jnp.eye(h_size, dtype=jnp.float32),
                    (num_edges, 1))                                     # (E*H, H)

    wv, attn = pl.pallas_call(
        _edge_attention_kernel,
        out_shape=(
            jax.ShapeDtypeStruct((batch, h_size), h_spatials.dtype),
            jax.ShapeDtypeStruct((batch, num_edges), jnp.float32),
        ),
        grid_spec=pltpu.PrefetchScalarGridSpec(
            num_scalar_prefetch=0,
            grid=(num_blocks,),
            in_specs=[
                pl.BlockSpec((block, h_size), lambda i: (i, 0)),
                pl.BlockSpec((block, eh), lambda i: (i, 0)),
                pl.BlockSpec((h_size, eh), lambda i: (0, 0)),
                pl.BlockSpec((1, eh), lambda i: (0, 0)),
                pl.BlockSpec((eh, num_edges), lambda i: (0, 0)),
                pl.BlockSpec((num_edges, eh), lambda i: (0, 0)),
                pl.BlockSpec((eh, h_size), lambda i: (0, 0)),
            ],
            out_specs=[
                pl.BlockSpec((block, h_size), lambda i: (i, 0)),
                pl.BlockSpec((block, num_edges), lambda i: (i, 0)),
            ],
        ),
        compiler_params=pltpu.CompilerParams(
            dimension_semantics=("parallel",)),
    )(ht, hs, w_fused, b_row, group, expand, fold)

    weighted_value = wv.reshape(seq_len, nenv, agent_num, h_size)
    attn_out = attn.reshape(seq_len * nenv * agent_num, human_num, 1)
    return weighted_value, attn_out


def _reference(h_temporal, h_spatials, w_t, b_t, w_s, b_s):
    """Pure-JAX reproduction of the PyTorch forward, for verification."""
    seq_len, nenv, agent_num, h_size = h_temporal.shape
    num_edges = h_spatials.shape[2]
    human_num = num_edges // agent_num
    a_size = w_t.shape[0]

    temporal_embed = h_temporal @ w_t.T + b_t                    # (S,N,1,A)
    spatial_embed = h_spatials @ w_s.T + b_s                     # (S,N,E,A)
    temporal_embed = jnp.repeat(temporal_embed, human_num, axis=2)

    attn = jnp.sum(temporal_embed * spatial_embed, axis=3)
    attn = attn * (num_edges / math.sqrt(a_size))
    attn = jax.nn.softmax(
        attn.reshape(seq_len, nenv, agent_num, human_num), axis=-1)

    hs = h_spatials.reshape(seq_len * nenv * agent_num, human_num, h_size)
    a = attn.reshape(seq_len * nenv * agent_num, human_num, 1)
    wv = jnp.sum(hs * a, axis=1).reshape(seq_len, nenv, agent_num, h_size)
    return wv, a


def _run_case(seq_len, nenv, human_num, h_size, attention_size, block_b):
    agent_num = 1
    num_edges = agent_num * human_num

    key = jax.random.PRNGKey(0)
    k = jax.random.split(key, 6)
    bound = 1.0 / math.sqrt(h_size)
    w_temporal = jax.random.uniform(k[0], (attention_size, h_size),
                                    jnp.float32, -bound, bound)
    b_temporal = jax.random.uniform(k[1], (attention_size,),
                                    jnp.float32, -bound, bound)
    w_spatial = jax.random.uniform(k[2], (attention_size, h_size),
                                   jnp.float32, -bound, bound)
    b_spatial = jax.random.uniform(k[3], (attention_size,),
                                   jnp.float32, -bound, bound)

    h_temporal = jax.random.normal(k[4], (seq_len, nenv, agent_num, h_size),
                                   jnp.float32)
    h_spatials = jax.random.normal(k[5], (seq_len, nenv, num_edges, h_size),
                                   jnp.float32)

    wv, attn = edge_attention(h_temporal, h_spatials,
                              w_temporal, b_temporal, w_spatial, b_spatial,
                              block_b=block_b)
    jax.block_until_ready((wv, attn))

    # Reference on bf16-quantized inputs (the kernel streams bf16), computed
    # in f32.  Remaining delta is just the bf16 quantization of the fused
    # weight matrix.
    ht_q = h_temporal.astype(jnp.bfloat16).astype(jnp.float32)
    hs_q = h_spatials.astype(jnp.bfloat16).astype(jnp.float32)
    wv_ref, attn_ref = _reference(ht_q, hs_q,
                                  w_temporal, b_temporal, w_spatial, b_spatial)

    assert wv.shape == (seq_len, nenv, agent_num, h_size)
    assert attn.shape == (seq_len * nenv * agent_num, human_num, 1)
    assert jnp.allclose(wv, wv_ref, rtol=2e-2, atol=2e-2)
    assert jnp.allclose(attn, attn_ref, rtol=2e-2, atol=2e-2)
    # exact softmax normalization (no approx reciprocal)
    assert jnp.allclose(jnp.sum(attn, axis=1), 1.0, atol=1e-5)


if __name__ == "__main__":
    # batch = 128 -> block 64, two grid steps (both TensorCores busy on v7x).
    _run_case(seq_len=16, nenv=8, human_num=4, h_size=32, attention_size=16,
              block_b=1024)
    # batch = 18, block 16 -> partial last block (no padding / slicing path).
    _run_case(seq_len=9, nenv=2, human_num=4, h_size=32, attention_size=16,
              block_b=1024)
    # tiny forced block -> 3 grid steps, last one partial.
    _run_case(seq_len=9, nenv=2, human_num=4, h_size=32, attention_size=16,
              block_b=8)
    print("KERNEL_OK")
</pallas_src>

<mosaic_0001>
module attributes {stable_mosaic.version = 11 : i64} {
  func.func @_edge_attention_kernel(%arg0: i32, %arg1: memref<64x32xbf16, #tpu.memory_space<vmem>>, %arg2: memref<64x128xbf16, #tpu.memory_space<vmem>>, %arg3: memref<32x128xbf16, #tpu.memory_space<vmem>>, %arg4: memref<1x128xf32, #tpu.memory_space<vmem>>, %arg5: memref<128x4xf32, #tpu.memory_space<vmem>>, %arg6: memref<4x128xf32, #tpu.memory_space<vmem>>, %arg7: memref<128x32xf32, #tpu.memory_space<vmem>>, %arg8: memref<64x32xf32, #tpu.memory_space<vmem>>, %arg9: memref<64x4xf32, #tpu.memory_space<vmem>>) attributes {dimension_semantics = [#tpu.dimension_semantics<parallel>], iteration_bounds = array<i64: 2>, scalar_prefetch = 0 : i64, scratch_operands = 0 : i64, tpu.core_type = #tpu.core_type<tc>, window_params = [{transform_indices = @transform_0, window_bounds = array<i64: 64, 32>}, {transform_indices = @transform_1, window_bounds = array<i64: 64, 128>}, {pipeline_mode = #tpu.pipeline_mode<synchronous>, transform_indices = @transform_2, window_bounds = array<i64: 32, 128>}, {pipeline_mode = #tpu.pipeline_mode<synchronous>, transform_indices = @transform_3, window_bounds = array<i64: 1, 128>}, {pipeline_mode = #tpu.pipeline_mode<synchronous>, transform_indices = @transform_4, window_bounds = array<i64: 128, 4>}, {pipeline_mode = #tpu.pipeline_mode<synchronous>, transform_indices = @transform_5, window_bounds = array<i64: 4, 128>}, {pipeline_mode = #tpu.pipeline_mode<synchronous>, transform_indices = @transform_6, window_bounds = array<i64: 128, 32>}, {transform_indices = @transform_7, window_bounds = array<i64: 64, 32>}, {transform_indices = @transform_8, window_bounds = array<i64: 64, 4>}]} {
    %c0 = arith.constant 0 : index
    %c0_0 = arith.constant 0 : index
    %0 = vector.load %arg1[%c0, %c0_0] : memref<64x32xbf16, #tpu.memory_space<vmem>>, vector<64x32xbf16>
    %c0_1 = arith.constant 0 : index
    %c0_2 = arith.constant 0 : index
    %1 = vector.load %arg2[%c0_1, %c0_2] : memref<64x128xbf16, #tpu.memory_space<vmem>>, vector<64x128xbf16>
    %2 = arith.extf %1 : vector<64x128xbf16> to vector<64x128xf32>
    %c0_3 = arith.constant 0 : index
    %c0_4 = arith.constant 0 : index
    %3 = vector.load %arg3[%c0_3, %c0_4] : memref<32x128xbf16, #tpu.memory_space<vmem>>, vector<32x128xbf16>
    %cst = arith.constant dense<0.000000e+00> : vector<64x128xf32>
    %4 = tpu.matmul %0, %3, %cst {dimension_numbers = #tpu.dot_dimension_numbers<[1], [0], [0], [1], [0, 0, 1, 1], [], []>} : vector<64x32xbf16>, vector<32x128xbf16>, vector<64x128xf32> -> vector<64x128xf32>
    %c0_5 = arith.constant 0 : index
    %c0_6 = arith.constant 0 : index
    %5 = vector.load %arg4[%c0_5, %c0_6] : memref<1x128xf32, #tpu.memory_space<vmem>>, vector<1x128xf32>
    %6 = vector.broadcast %5 : vector<1x128xf32> to vector<64x128xf32>
    %7 = arith.addf %4, %6 : vector<64x128xf32>
    %8 = arith.mulf %2, %7 : vector<64x128xf32>
    %c0_7 = arith.constant 0 : index
    %c0_8 = arith.constant 0 : index
    %9 = vector.load %arg5[%c0_7, %c0_8] : memref<128x4xf32, #tpu.memory_space<vmem>>, vector<128x4xf32>
    %cst_9 = arith.constant dense<0.000000e+00> : vector<64x4xf32>
    %10 = tpu.matmul %8, %9, %cst_9 {dimension_numbers = #tpu.dot_dimension_numbers<[1], [0], [0], [1], [0, 0, 1, 1], [], []>} : vector<64x128xf32>, vector<128x4xf32>, vector<64x4xf32> -> vector<64x4xf32>
    %cst_10 = arith.constant dense<0xFF800000> : vector<64xf32>
    %11 = vector.multi_reduction <maximumf>, %10, %cst_10 [1] : vector<64x4xf32> to vector<64xf32>
    %12 = vector.shape_cast %11 : vector<64xf32> to vector<64x1xf32>
    %13 = vector.broadcast %12 : vector<64x1xf32> to vector<64x4xf32>
    %14 = arith.subf %10, %13 : vector<64x4xf32>
    %15 = math.exp %14 : vector<64x4xf32>
    %cst_11 = arith.constant dense<0.000000e+00> : vector<64xf32>
    %16 = vector.multi_reduction <add>, %15, %cst_11 [1] : vector<64x4xf32> to vector<64xf32>
    %17 = vector.shape_cast %16 : vector<64xf32> to vector<64x1xf32>
    %18 = vector.broadcast %17 : vector<64x1xf32> to vector<64x4xf32>
    %19 = arith.divf %15, %18 : vector<64x4xf32>
    %c0_12 = arith.constant 0 : index
    %c0_13 = arith.constant 0 : index
    %20 = vector.load %arg6[%c0_12, %c0_13] : memref<4x128xf32, #tpu.memory_space<vmem>>, vector<4x128xf32>
    %cst_14 = arith.constant dense<0.000000e+00> : vector<64x128xf32>
    %21 = tpu.matmul %19, %20, %cst_14 {dimension_numbers = #tpu.dot_dimension_numbers<[1], [0], [0], [1], [0, 0, 1, 1], [], []>} : vector<64x4xf32>, vector<4x128xf32>, vector<64x128xf32> -> vector<64x128xf32>
    %22 = arith.mulf %21, %2 : vector<64x128xf32>
    %c0_15 = arith.constant 0 : index
    %c0_16 = arith.constant 0 : index
    %23 = vector.load %arg7[%c0_15, %c0_16] : memref<128x32xf32, #tpu.memory_space<vmem>>, vector<128x32xf32>
    %cst_17 = arith.constant dense<0.000000e+00> : vector<64x32xf32>
    %24 = tpu.matmul %22, %23, %cst_17 {dimension_numbers = #tpu.dot_dimension_numbers<[1], [0], [0], [1], [0, 0, 1, 1], [], []>} : vector<64x128xf32>, vector<128x32xf32>, vector<64x32xf32> -> vector<64x32xf32>
    %c0_18 = arith.constant 0 : index
    %c0_19 = arith.constant 0 : index
    %25 = vector.load %arg8[%c0_18, %c0_19] : memref<64x32xf32, #tpu.memory_space<vmem>>, vector<64x32xf32>
    tpu.vector_store %arg8[%c0_18, %c0_19], %24 {strides = array<i32>} : memref<64x32xf32, #tpu.memory_space<vmem>>, vector<64x32xf32>,
    %c0_20 = arith.constant 0 : index
    %c0_21 = arith.constant 0 : index
    %26 = vector.load %arg9[%c0_20, %c0_21] : memref<64x4xf32, #tpu.memory_space<vmem>>, vector<64x4xf32>
    tpu.vector_store %arg9[%c0_20, %c0_21], %19 {strides = array<i32>} : memref<64x4xf32, #tpu.memory_space<vmem>>, vector<64x4xf32>,
    return
  }
  func.func @transform_0(%arg0: i32) -> (i32, i32) {
    %c0_i32 = arith.constant 0 : i32
    %c0_i32_0 = arith.constant 0 : i32
    return %arg0, %c0_i32 : i32, i32
  }
  func.func @transform_1(%arg0: i32) -> (i32, i32) {
    %c0_i32 = arith.constant 0 : i32
    %c0_i32_0 = arith.constant 0 : i32
    return %arg0, %c0_i32 : i32, i32
  }
  func.func @transform_2(%arg0: i32) -> (i32, i32) {
    %c0_i32 = arith.constant 0 : i32
    %c0_i32_0 = arith.constant 0 : i32
    %c0_i32_1 = arith.constant 0 : i32
    return %c0_i32, %c0_i32_0 : i32, i32
  }
  func.func @transform_3(%arg0: i32) -> (i32, i32) {
    %c0_i32 = arith.constant 0 : i32
    %c0_i32_0 = arith.constant 0 : i32
    %c0_i32_1 = arith.constant 0 : i32
    return %c0_i32, %c0_i32_0 : i32, i32
  }
  func.func @transform_4(%arg0: i32) -> (i32, i32) {
    %c0_i32 = arith.constant 0 : i32
    %c0_i32_0 = arith.constant 0 : i32
    %c0_i32_1 = arith.constant 0 : i32
    return %c0_i32, %c0_i32_0 : i32, i32
  }
  func.func @transform_5(%arg0: i32) -> (i32, i32) {
    %c0_i32 = arith.constant 0 : i32
    %c0_i32_0 = arith.constant 0 : i32
    %c0_i32_1 = arith.constant 0 : i32
    return %c0_i32, %c0_i32_0 : i32, i32
  }
  func.func @transform_6(%arg0: i32) -> (i32, i32) {
    %c0_i32 = arith.constant 0 : i32
    %c0_i32_0 = arith.constant 0 : i32
    %c0_i32_1 = arith.constant 0 : i32
    return %c0_i32, %c0_i32_0 : i32, i32
  }
  func.func @transform_7(%arg0: i32) -> (i32, i32) {
    %c0_i32 = arith.constant 0 : i32
    %c0_i32_0 = arith.constant 0 : i32
    return %arg0, %c0_i32 : i32, i32
  }
  func.func @transform_8(%arg0: i32) -> (i32, i32) {
    %c0_i32 = arith.constant 0 : i32
    %c0_i32_0 = arith.constant 0 : i32
    return %arg0, %c0_i32 : i32, i32
  }
}

</mosaic_0001>

<llo_original>
// kernel: tpu_custom_call.1
$region0: #{tpu_custom_call.1}
  #allocation0 [shape = 'u32[]', space=smem, size = 0x4, offset = 0x4, fixed_abs, tag = 'smem constant byte address 0x4 - core index']
  #allocation1 [shape = 'u32[144,128]{1,0:T(1,128)}', space=vmem, size = 0x12000, scoped, tag = 'internal scratch']
  %s0 = inlined_call_operand.vmem [shape: bf16[128,32], index: 0, kind: input, shape index: {}]
  %s1 = inlined_call_operand.vmem [shape: bf16[128,128], index: 1, kind: input, shape index: {}]
  %s2 = inlined_call_operand.vmem [shape: bf16[32,128], index: 2, kind: input, shape index: {}]
  %s3 = inlined_call_operand.vmem [shape: f32[1,128], index: 3, kind: input, shape index: {}]
  %s4 = inlined_call_operand.vmem [shape: f32[128,4], index: 4, kind: input, shape index: {}]
  %s5 = inlined_call_operand.vmem [shape: f32[4,128], index: 5, kind: input, shape index: {}]
  %s6 = inlined_call_operand.vmem [shape: f32[128,32], index: 6, kind: input, shape index: {}]
  %s7 = inlined_call_operand.vmem [shape: f32[128,32], index: 7, kind: output, shape index: {0}]
  %s8 = inlined_call_operand.vmem [shape: f32[128,4], index: 8, kind: output, shape index: {1}]
  %9 = xla_tuple %s7, %s8
  %s10 = sld [smem:[#allocation0]]
  $region69: #{tpu_custom_call.1} parent=0
    _
  %s12 = ssub.s32 1, %s10
  %s13 = scalar_select 0, %s12, %s10
  loop: start=0, step=1, limit=4
  $region2: #{tpu_custom_call.1} parent=0 // loop_pre_header
    _
  $region3: #{tpu_custom_call.1} parent=0 // loop_header
    %s15 = sphi 0, %s19
    %p16 = scmp.ge.s32.totalorder %s15, 4
    %s25 = sphi 0, %s27
    %s28 = sphi 0, %s25
    %s29 = sphi 0, %s28
    %s45 = sphi 0, %s29
    %s51 = sphi 0, %s53
    %s54 = sphi 0, %s51
    %s55 = sphi 0, %s54
    %s71 = sphi 0, %s55
    %s75 = sphi 0, %s75
    %s77 = sphi 0, %s75
    %s78 = sphi 0, %s77
    %s92 = sphi 0, %s78
    %s96 = sphi 0, %s96
    %s98 = sphi 0, %s96
    %s99 = sphi 0, %s98
    %s113 = sphi 0, %s99
    %s117 = sphi 0, %s117
    %s119 = sphi 0, %s117
    %s120 = sphi 0, %s119
    %s134 = sphi 0, %s120
    %s138 = sphi 0, %s138
    %s140 = sphi 0, %s138
    %s141 = sphi 0, %s140
    %s155 = sphi 0, %s141
    %s159 = sphi 0, %s159
    %s161 = sphi 0, %s159
    %s162 = sphi 0, %s161
    %s176 = sphi 0, %s162
    %s182 = sphi 0, %s184
    %s185 = sphi 0, %s182
    %s186 = sphi 0, %s185
    %s202 = sphi 0, %s186
    %s208 = sphi 0, %s210
    %s211 = sphi 0, %s208
    %s212 = sphi 0, %s211
    %s228 = sphi 0, %s212
  $region4: #{tpu_custom_call.1} parent=0 // loop_header_branch
    %18 = sbr.rel (%p16) target = $region8
  $region5: #{tpu_custom_call.1} parent=0 // loop_body
    %s20 = ssub.s32 %s15, 1
    %s21 = ssub.s32 %s15, 2
    %s22 = sadd.s32 %s15, 1
    %s23 = ssub.s32 %s15, %s22
    %p24 = scmp.eq.s32.totalorder %s23, 0
    %s26 = sadd.s32 %s25, 1
    %s27 = scalar_select %p24, %s25, %s26
    %p30 = pneg %p24
    %p31 = scmp.eq.s32.totalorder %s15, 1
    %p32 = por %p30, %p31
    %p33 = scmp.ne.s32.totalorder %s25, %s28
    %p34 = scmp.eq.s32.totalorder %s15, 0
    %p35 = por %p33, %p34
    %p36 = scmp.ne.s32.totalorder %s25, %s28
    %p37 = scmp.eq.s32.totalorder %s20, 1
    %p38 = por %p36, %p37
    %p39 = scmp.ne.s32.totalorder %s28, %s29
    %p40 = scmp.eq.s32.totalorder %s20, 0
    %p41 = por %p39, %p40
    %p42 = scmp.ne.s32.totalorder %s28, %s29
    %p43 = scmp.eq.s32.totalorder %s21, 1
    %p44 = por %p42, %p43
    %p46 = scmp.ne.s32.totalorder %s29, %s45
    %p47 = scmp.eq.s32.totalorder %s21, 0
    %p48 = por %p46, %p47
    %s49 = ssub.s32 %s15, %s22
    %p50 = scmp.eq.s32.totalorder %s49, 0
    %s52 = sadd.s32 %s51, 1
    %s53 = scalar_select %p50, %s51, %s52
    %p56 = pneg %p50
    %p57 = scmp.eq.s32.totalorder %s15, 1
    %p58 = por %p56, %p57
    %p59 = scmp.ne.s32.totalorder %s51, %s54
    %p60 = scmp.eq.s32.totalorder %s15, 0
    %p61 = por %p59, %p60
    %p62 = scmp.ne.s32.totalorder %s51, %s54
    %p63 = scmp.eq.s32.totalorder %s20, 1
    %p64 = por %p62, %p63
    %p65 = scmp.ne.s32.totalorder %s54, %s55
    %p66 = scmp.eq.s32.totalorder %s20, 0
    %p67 = por %p65, %p66
    %p68 = scmp.ne.s32.totalorder %s54, %s55
    %p69 = scmp.eq.s32.totalorder %s21, 1
    %p70 = por %p68, %p69
    %p72 = scmp.ne.s32.totalorder %s55, %s71
    %p73 = scmp.eq.s32.totalorder %s21, 0
    %p74 = por %p72, %p73
    %s76 = sadd.s32 %s75, 1
    %p79 = scmp.eq.s32.totalorder %s15, 1
    %p80 = scmp.ne.s32.totalorder %s75, %s77
    %p81 = scmp.eq.s32.totalorder %s15, 0
    %p82 = por %p80, %p81
    %p83 = scmp.ne.s32.totalorder %s75, %s77
    %p84 = scmp.eq.s32.totalorder %s20, 1
    %p85 = por %p83, %p84
    %p86 = scmp.ne.s32.totalorder %s77, %s78
    %p87 = scmp.eq.s32.totalorder %s20, 0
    %p88 = por %p86, %p87
    %p89 = scmp.ne.s32.totalorder %s77, %s78
    %p90 = scmp.eq.s32.totalorder %s21, 1
    %p91 = por %p89, %p90
    %p93 = scmp.ne.s32.totalorder %s78, %s92
    %p94 = scmp.eq.s32.totalorder %s21, 0
    %p95 = por %p93, %p94
    %s97 = sadd.s32 %s96, 1
    %p100 = scmp.eq.s32.totalorder %s15, 1
    %p101 = scmp.ne.s32.totalorder %s96, %s98
    %p102 = scmp.eq.s32.totalorder %s15, 0
    %p103 = por %p101, %p102
    %p104 = scmp.ne.s32.totalorder %s96, %s98
    %p105 = scmp.eq.s32.totalorder %s20, 1
    %p106 = por %p104, %p105
    %p107 = scmp.ne.s32.totalorder %s98, %s99
    %p108 = scmp.eq.s32.totalorder %s20, 0
    %p109 = por %p107, %p108
    %p110 = scmp.ne.s32.totalorder %s98, %s99
    %p111 = scmp.eq.s32.totalorder %s21, 1
    %p112 = por %p110, %p111
    %p114 = scmp.ne.s32.totalorder %s99, %s113
    %p115 = scmp.eq.s32.totalorder %s21, 0
    %p116 = por %p114, %p115
    %s118 = sadd.s32 %s117, 1
    %p121 = scmp.eq.s32.totalorder %s15, 1
    %p122 = scmp.ne.s32.totalorder %s117, %s119
    %p123 = scmp.eq.s32.totalorder %s15, 0
    %p124 = por %p122, %p123
    %p125 = scmp.ne.s32.totalorder %s117, %s119
    %p126 = scmp.eq.s32.totalorder %s20, 1
    %p127 = por %p125, %p126
    %p128 = scmp.ne.s32.totalorder %s119, %s120
    %p129 = scmp.eq.s32.totalorder %s20, 0
    %p130 = por %p128, %p129
    %p131 = scmp.ne.s32.totalorder %s119, %s120
    %p132 = scmp.eq.s32.totalorder %s21, 1
    %p133 = por %p131, %p132
    %p135 = scmp.ne.s32.totalorder %s120, %s134
    %p136 = scmp.eq.s32.totalorder %s21, 0
    %p137 = por %p135, %p136
    %s139 = sadd.s32 %s138, 1
    %p142 = scmp.eq.s32.totalorder %s15, 1
    %p143 = scmp.ne.s32.totalorder %s138, %s140
    %p144 = scmp.eq.s32.totalorder %s15, 0
    %p145 = por %p143, %p144
    %p146 = scmp.ne.s32.totalorder %s138, %s140
    %p147 = scmp.eq.s32.totalorder %s20, 1
    %p148 = por %p146, %p147
    %p149 = scmp.ne.s32.totalorder %s140, %s141
    %p150 = scmp.eq.s32.totalorder %s20, 0
    %p151 = por %p149, %p150
    %p152 = scmp.ne.s32.totalorder %s140, %s141
    %p153 = scmp.eq.s32.totalorder %s21, 1
    %p154 = por %p152, %p153
    %p156 = scmp.ne.s32.totalorder %s141, %s155
    %p157 = scmp.eq.s32.totalorder %s21, 0
    %p158 = por %p156, %p157
    %s160 = sadd.s32 %s159, 1
    %p163 = scmp.eq.s32.totalorder %s15, 1
    %p164 = scmp.ne.s32.totalorder %s159, %s161
    %p165 = scmp.eq.s32.totalorder %s15, 0
    %p166 = por %p164, %p165
    %p167 = scmp.ne.s32.totalorder %s159, %s161
    %p168 = scmp.eq.s32.totalorder %s20, 1
    %p169 = por %p167, %p168
    %p170 = scmp.ne.s32.totalorder %s161, %s162
    %p171 = scmp.eq.s32.totalorder %s20, 0
    %p172 = por %p170, %p171
    %p173 = scmp.ne.s32.totalorder %s161, %s162
    %p174 = scmp.eq.s32.totalorder %s21, 1
    %p175 = por %p173, %p174
    %p177 = scmp.ne.s32.totalorder %s162, %s176
    %p178 = scmp.eq.s32.totalorder %s21, 0
    %p179 = por %p177, %p178
    %s180 = ssub.s32 %s15, %s22
    %p181 = scmp.eq.s32.totalorder %s180, 0
    %s183 = sadd.s32 %s182, 1
    %s184 = scalar_select %p181, %s182, %s183
    %p187 = pneg %p181
    %p188 = scmp.eq.s32.totalorder %s15, 1
    %p189 = por %p187, %p188
    %p190 = scmp.ne.s32.totalorder %s182, %s185
    %p191 = scmp.eq.s32.totalorder %s15, 0
    %p192 = por %p190, %p191
    %p193 = scmp.ne.s32.totalorder %s182, %s185
    %p194 = scmp.eq.s32.totalorder %s20, 1
    %p195 = por %p193, %p194
    %p196 = scmp.ne.s32.totalorder %s185, %s186
    %p197 = scmp.eq.s32.totalorder %s20, 0
    %p198 = por %p196, %p197
    %p199 = scmp.ne.s32.totalorder %s185, %s186
    %p200 = scmp.eq.s32.totalorder %s21, 1
    %p201 = por %p199, %p200
    %p203 = scmp.ne.s32.totalorder %s186, %s202
    %p204 = scmp.eq.s32.totalorder %s21, 0
    %p205 = por %p203, %p204
    %s206 = ssub.s32 %s15, %s22
    %p207 = scmp.eq.s32.totalorder %s206, 0
    %s209 = sadd.s32 %s208, 1
    %s210 = scalar_select %p207, %s208, %s209
    %p213 = pneg %p207
    %p214 = scmp.eq.s32.totalorder %s15, 1
    %p215 = por %p213, %p214
    %p216 = scmp.ne.s32.totalorder %s208, %s211
    %p217 = scmp.eq.s32.totalorder %s15, 0
    %p218 = por %p216, %p217
    %p219 = scmp.ne.s32.totalorder %s208, %s211
    %p220 = scmp.eq.s32.totalorder %s20, 1
    %p221 = por %p219, %p220
    %p222 = scmp.ne.s32.totalorder %s211, %s212
    %p223 = scmp.eq.s32.totalorder %s20, 0
    %p224 = por %p222, %p223
    %p225 = scmp.ne.s32.totalorder %s211, %s212
    %p226 = scmp.eq.s32.totalorder %s21, 1
    %p227 = por %p225, %p226
    %p229 = scmp.ne.s32.totalorder %s212, %s228
    %p230 = scmp.eq.s32.totalorder %s21, 0
    %p231 = por %p229, %p230
    %p232 = scmp.le.s32.totalorder 1, %s15
    %p233 = scmp.lt.s32.totalorder %s15, 3
    %p234 = pnand %p232, %p233
    %p235 = pneg %p234
    // Predicated region
    $region9: #{tpu_custom_call.1} parent=5 // pred_check
      _
    $region10: #{tpu_custom_call.1} parent=5 // pred_check_branch
      %237 = sbr.rel (%p234) target = $region12
    $region11: #{tpu_custom_call.1} parent=5 // pred_region
      %s238 = ssub.s32 %s15, 1
      // Predicated region
      $region13: #{tpu_custom_call.1} parent=11 // pred_check
        %p239 = pneg %p88
      $region14: #{tpu_custom_call.1} parent=11 // pred_check_branch
        %241 = sbr.rel (%p239) target = $region16
      $region15: #{tpu_custom_call.1} parent=11 // pred_region
        _
      $region16: #{tpu_custom_call.1} parent=11 // pred_fallthru
        _
      // Predicated region
      $region17: #{tpu_custom_call.1} parent=11 // pred_check
        %p242 = pneg %p109
      $region18: #{tpu_custom_call.1} parent=11 // pred_check_branch
        %244 = sbr.rel (%p242) target = $region20
      $region19: #{tpu_custom_call.1} parent=11 // pred_region
        _
      $region20: #{tpu_custom_call.1} parent=11 // pred_fallthru
        _
      // Predicated region
      $region21: #{tpu_custom_call.1} parent=11 // pred_check
        %p245 = pneg %p130
      $region22: #{tpu_custom_call.1} parent=11 // pred_check_branch
        %247 = sbr.rel (%p245) target = $region24
      $region23: #{tpu_custom_call.1} parent=11 // pred_region
        _
      $region24: #{tpu_custom_call.1} parent=11 // pred_fallthru
        _
      // Predicated region
      $region25: #{tpu_custom_call.1} parent=11 // pred_check
        %p248 = pneg %p151
      $region26: #{tpu_custom_call.1} parent=11 // pred_check_branch
        %250 = sbr.rel (%p248) target = $region28
      $region27: #{tpu_custom_call.1} parent=11 // pred_region
        _
      $region28: #{tpu_custom_call.1} parent=11 // pred_fallthru
        _
      // Predicated region
      $region29: #{tpu_custom_call.1} parent=11 // pred_check
        %p251 = pneg %p172
      $region30: #{tpu_custom_call.1} parent=11 // pred_check_branch
        %253 = sbr.rel (%p251) target = $region32
      $region31: #{tpu_custom_call.1} parent=11 // pred_region
        _
      $region32: #{tpu_custom_call.1} parent=11 // pred_fallthru
        _
    $region12: #{tpu_custom_call.1} parent=5 // pred_fallthru
      _
    %p254 = scmp.lt.s32.totalorder %s15, 2
    // Predicated region
    $region33: #{tpu_custom_call.1} parent=5 // pred_check
      %p255 = pneg %p254
    $region34: #{tpu_custom_call.1} parent=5 // pred_check_branch
      %257 = sbr.rel (%p255) target = $region36
    $region35: #{tpu_custom_call.1} parent=5 // pred_region
      // Predicated region
      $region37: #{tpu_custom_call.1} parent=35 // pred_check
        %p258 = pneg %p35
      $region38: #{tpu_custom_call.1} parent=35 // pred_check_branch
        %260 = sbr.rel (%p258) target = $region40
      $region39: #{tpu_custom_call.1} parent=35 // pred_region
        %s261 = smul.u32 8, %s15
        %p262 = scmp.lt.s32.totalorder %s261, 15
        %s263 = scalar_select %p262, %s261, 15
        %s264 = smul.addr %s263, 4
        %s265 = scalar_lea.vmem %s0, %s264
        %s266 = smul.u32 8, %s15
      $region40: #{tpu_custom_call.1} parent=35 // pred_fallthru
        _
      // Predicated region
      $region41: #{tpu_custom_call.1} parent=35 // pred_check
        %p267 = pneg %p61
      $region42: #{tpu_custom_call.1} parent=35 // pred_check_branch
        %269 = sbr.rel (%p267) target = $region44
      $region43: #{tpu_custom_call.1} parent=35 // pred_region
        %s270 = smul.u32 8, %s15
        %p271 = scmp.lt.s32.totalorder %s270, 15
        %s272 = scalar_select %p271, %s270, 15
        %s273 = smul.addr %s272, 4
        %s274 = scalar_lea.vmem %s1, %s273
        %s275 = smul.u32 8, %s15
      $region44: #{tpu_custom_call.1} parent=35 // pred_fallthru
        _
    $region36: #{tpu_custom_call.1} parent=5 // pred_fallthru
      _
    %p276 = scmp.le.s32.totalorder 1, %s15
    %p277 = scmp.lt.s32.totalorder %s15, 3
    %p278 = pnand %p276, %p277
    %p279 = pneg %p278
    // Predicated region
    $region45: #{tpu_custom_call.1} parent=5 // pred_check
      _
    $region46: #{tpu_custom_call.1} parent=5 // pred_check_branch
      %281 = sbr.rel (%p278) target = $region48
    $region47: #{tpu_custom_call.1} parent=5 // pred_region
      %s282 = ssub.s32 %s15, 1
      %s283 = smul.u32 8, %s20
      %p284 = scmp.lt.s32.totalorder %s283, 15
      %s285 = scalar_select %p284, %s283, 15
      %s286 = smul.addr %s285, 4
      %s287 = scalar_lea.vmem %s0, %s286
      %p288 = pneg %p41
      %p289 = pneg %p38
      %s290 = smul.u32 8, %s20
      %p291 = scmp.lt.s32.totalorder %s290, 15
      %s292 = scalar_select %p291, %s290, 15
      %s293 = smul.addr %s292, 4
      %s294 = scalar_lea.vmem %s1, %s293
      %p295 = pneg %p67
      %p296 = pneg %p64
      %p297 = pneg %p88
      %p298 = pneg %p85
      %p299 = pneg %p109
      %p300 = pneg %p106
      %p301 = pneg %p130
      %p302 = pneg %p127
      %p303 = pneg %p151
      %p304 = pneg %p148
      %p305 = pneg %p172
      %p306 = pneg %p169
      %p307 = pneg %p198
      %p308 = pneg %p195
      %s309 = smul.u32 8, %s20
      %p310 = scmp.lt.s32.totalorder %s309, 15
      %s311 = scalar_select %p310, %s309, 15
      %s312 = smul.addr %s311, 8
      %s313 = scalar_lea.vmem %s7, %s312
      %p314 = pneg %p224
      %p315 = pneg %p221
      %s316 = smul.u32 8, %s20
      %p317 = scmp.lt.s32.totalorder %s316, 15
      %s318 = scalar_select %p317, %s316, 15
      %s319 = smul.addr %s318, 8
      %s320 = scalar_lea.vmem %s8, %s319
      %s321 = smul.u32 8, %s20
      %p322 = scmp.lt.s32.totalorder %s321, 15
      %s323 = scalar_select %p322, %s321, 15
      %s324 = smul.addr %s323, 4
      %s325 = scalar_lea.vmem %s0, %s324
      %s326 = smul.u32 8, %s20
      %s327 = smul.u32 8, %s20
      %p328 = scmp.lt.s32.totalorder %s327, 15
      %s329 = scalar_select %p328, %s327, 15
      %s330 = smul.addr %s329, 4
      %s331 = scalar_lea.vmem %s1, %s330
      %s332 = smul.u32 8, %s20
      %s333 = smul.u32 8, %s20
      %p334 = scmp.lt.s32.totalorder %s333, 15
      %s335 = scalar_select %p334, %s333, 15
      %s336 = smul.addr %s335, 8
      %s337 = scalar_lea.vmem %s7, %s336
      %s338 = smul.u32 8, %s20
      %s339 = smul.u32 8, %s20
      %p340 = scmp.lt.s32.totalorder %s339, 15
      %s341 = scalar_select %p340, %s339, 15
      %s342 = smul.addr %s341, 8
      %s343 = scalar_lea.vmem %s8, %s342
      %s344 = smul.u32 8, %s20
      %v346 = vld [vmem:[%s325] sm:$0xf]
      %v347 = vld [vmem:[%s325 + $0x4] sm:$0xf]
      %v348 = vld [vmem:[%s325 + $0x8] sm:$0xf]
      %v349 = vld [vmem:[%s325 + $0xc] sm:$0xf]
      %v350 = vld [vmem:[%s325 + $0x10] sm:$0xf]
      %v351 = vld [vmem:[%s325 + $0x14] sm:$0xf]
      %v352 = vld [vmem:[%s325 + $0x18] sm:$0xf]
      %v353 = vld [vmem:[%s325 + $0x1c] sm:$0xf]
      %v354 = vld [vmem:[%s331] sm:$0xf]
      %v355 = vld [vmem:[%s331 + $0x4] sm:$0xf]
      %v356 = vld [vmem:[%s331 + $0x8] sm:$0xf]
      %v357 = vld [vmem:[%s331 + $0xc] sm:$0xf]
      %v358 = vld [vmem:[%s331 + $0x10] sm:$0xf]
      %v359 = vld [vmem:[%s331 + $0x14] sm:$0xf]
      %v360 = vld [vmem:[%s331 + $0x18] sm:$0xf]
      %v361 = vld [vmem:[%s331 + $0x1c] sm:$0xf]
      %v362 = vunpack.c.l.bf16 %v354
      %v363 = vunpack.c.l.bf16 %v355
      %v364 = vunpack.c.l.bf16 %v356
      %v365 = vunpack.c.l.bf16 %v357
      %v366 = vunpack.c.l.bf16 %v358
      %v367 = vunpack.c.l.bf16 %v359
      %v368 = vunpack.c.l.bf16 %v360
      %v369 = vunpack.c.l.bf16 %v361
      %v370 = vld [vmem:[%s2] sm:$0xf]
      %v371 = vld [vmem:[%s2 + $0x4] sm:$0xf]
      %v372 = vld [vmem:[%s2 + $0x8] sm:$0xf]
      %v373 = vld [vmem:[%s2 + $0xc] sm:$0xf]
      %v374 = vld [vmem:[%s3] sm:$0x1]
      %v376 = vlaneseq
      %v377 = vshrl.u32 %v376, 7
      %v378 = vsub.s32 0, %v377
      %v379 = vrot.slane %v374, %v378
      %v389 = vunpack.c.l.b16 %v346
      %v390 = vunpack.c.l.b16 %v347
      %v391 = vunpack.c.l.b16 %v348
      %v392 = vunpack.c.l.b16 %v349
      %v393 = vunpack.c.l.b16 %v350
      %v394 = vunpack.c.l.b16 %v351
      %v395 = vunpack.c.l.b16 %v352
      %v396 = vunpack.c.l.b16 %v353
      %v397 = vpack.c.b16 %v390, %v389
      %v398 = vpack.c.b16 %v392, %v391
      %v399 = vpack.c.b16 %v394, %v393
      %v400 = vpack.c.b16 %v396, %v395
      %v405 = vunpack.c.l.b16 %v370
      %v406 = vunpack.c.l.b16 %v371
      %v407 = vunpack.c.l.b16 %v372
      %v408 = vunpack.c.l.b16 %v373
      %v409 = vpack.c.b16 %v406, %v405
      %v410 = vpack.c.b16 %v408, %v407
      %vm413 = vcmask 261120
      %v415 = vsel %vm413, %v397, 0
      %v418 = vsel %vm413, %v398, 0
      %v421 = vsel %vm413, %v399, 0
      %v424 = vsel %vm413, %v400, 0
      %426 = vmatprep.subr.bf16.mxu0 0
      %427 = vmatpush1.bf16.msra.mxu0 %v409
      %428 = vmatprep.subr.bf16.mxu0 0
      %429 = vmatpush1.bf16.msra.mxu0 %v410
      %430 = vmatprep.subr.bf16.mxu0 0
      %431 = vmatpush1.bf16.msra.mxu0 0
      %432 = vmatprep.subr.bf16.mxu0 0
      %433 = vmatpush1.bf16.msra.mxu0 0
      %434 = vmatprep.subr.bf16.mxu0 0
      %435 = vmatpush1.bf16.msra.mxu0 0
      %436 = vmatprep.subr.bf16.mxu0 0
      %437 = vmatpush1.bf16.msra.mxu0 0
      %438 = vmatprep.subr.bf16.mxu0 0
      %439 = vmatpush1.bf16.msra.mxu0 0
      %440 = vmatprep.subr.bf16.mxu0 0
      %441 = vmatpush1.bf16.msra.mxu0 0
      %442 = vmatprep.subr.bf16.mxu0 0
      %443 = vmatpush1.bf16.msra.mxu0 0
      %444 = vmatprep.subr.bf16.mxu0 0
      %445 = vmatpush1.bf16.msra.mxu0 0
      %446 = vmatprep.subr.bf16.mxu0 0
      %447 = vmatpush1.bf16.msra.mxu0 0
      %448 = vmatprep.subr.bf16.mxu0 0
      %449 = vmatpush1.bf16.msra.mxu0 0
      %450 = vmatprep.subr.bf16.mxu0 0
      %451 = vmatpush1.bf16.msra.mxu0 0
      %452 = vmatprep.subr.bf16.mxu0 0
      %453 = vmatpush1.bf16.msra.mxu0 0
      %454 = vmatprep.subr.bf16.mxu0 0
      %455 = vmatpush1.bf16.msra.mxu0 0
      %456 = vmatprep.subr.bf16.mxu0 0
      %457 = vmatpush1.bf16.msra.mxu0 0
      %458 = vmatprep.mubr.bf16.mxu0 0
      %459 = vmatmul.mubr.bf16.gmra.mrb[0].mxu0 %v415
      %v460 = vpop.f32.mrb[0].mxu0
      %v461 = vadd.f32 %v379, %v460
      %v462 = vpop.f32.mrb[0].mxu0
      %v463 = vpop.f32.mrb[0].mxu0
      %v464 = vadd.f32 %v379, %v463
      %v465 = vpop.f32.mrb[0].mxu0
      %466 = vmatprep.mubr.bf16.mxu0 0
      %467 = vmatmul.mubr.bf16.gmra.mrb[0].mxu0 %v418
      %v468 = vpop.f32.mrb[0].mxu0
      %v469 = vadd.f32 %v379, %v468
      %v470 = vpop.f32.mrb[0].mxu0
      %v471 = vpop.f32.mrb[0].mxu0
      %v472 = vadd.f32 %v379, %v471
      %v473 = vpop.f32.mrb[0].mxu0
      %474 = vmatprep.mubr.bf16.mxu0 0
      %475 = vmatmul.mubr.bf16.gmra.mrb[0].mxu0 %v421
      %v476 = vpop.f32.mrb[0].mxu0
      %v477 = vadd.f32 %v379, %v476
      %v478 = vpop.f32.mrb[0].mxu0
      %v479 = vpop.f32.mrb[0].mxu0
      %v480 = vadd.f32 %v379, %v479
      %v481 = vpop.f32.mrb[0].mxu0
      %482 = vmatprep.mubr.bf16.mxu0 0
      %483 = vmatmul.mubr.bf16.gmra.mrb[0].mxu0 %v424
      %v484 = vpop.f32.mrb[0].mxu0
      %v485 = vadd.f32 %v379, %v484
      %v486 = vpop.f32.mrb[0].mxu0
      %v487 = vpop.f32.mrb[0].mxu0
      %v488 = vadd.f32 %v379, %v487
      %v489 = vpop.f32.mrb[0].mxu0
      %490 = vdwg.mxu0
      %v491 = vmul.f32 %v362, %v461
      %v492 = vmul.f32 %v363, %v464
      %v493 = vmul.f32 %v364, %v469
      %v494 = vmul.f32 %v365, %v472
      %v495 = vmul.f32 %v366, %v477
      %v496 = vmul.f32 %v367, %v480
      %v497 = vmul.f32 %v368, %v485
      %v498 = vmul.f32 %v369, %v488
      %v499 = vld [vmem:[%s4] sm:$0xff]
      %v500 = vld [vmem:[%s4 + $0x8] sm:$0xff]
      %v501 = vld [vmem:[%s4 + $0x10] sm:$0xff]
      %v502 = vld [vmem:[%s4 + $0x18] sm:$0xff]
      %v503 = vld [vmem:[%s4 + $0x20] sm:$0xff]
      %v504 = vld [vmem:[%s4 + $0x28] sm:$0xff]
      %v505 = vld [vmem:[%s4 + $0x30] sm:$0xff]
      %v506 = vld [vmem:[%s4 + $0x38] sm:$0xff]
      %v507 = vld [vmem:[%s4 + $0x40] sm:$0xff]
      %v508 = vld [vmem:[%s4 + $0x48] sm:$0xff]
      %v509 = vld [vmem:[%s4 + $0x50] sm:$0xff]
      %v510 = vld [vmem:[%s4 + $0x58] sm:$0xff]
      %v511 = vld [vmem:[%s4 + $0x60] sm:$0xff]
      %v512 = vld [vmem:[%s4 + $0x68] sm:$0xff]
      %v513 = vld [vmem:[%s4 + $0x70] sm:$0xff]
      %v514 = vld [vmem:[%s4 + $0x78] sm:$0xff]
      %515 = vmatprep.subr.mxu0 0.0
      %516 = vmatpush1.msra.mxu0 %v499
      %517 = vmatprep.subr.mxu0 0.0
      %518 = vmatpush1.msra.mxu0 %v500
      %519 = vmatprep.subr.mxu0 0.0
      %520 = vmatpush1.msra.mxu0 %v501
      %521 = vmatprep.subr.mxu0 0.0
      %522 = vmatpush1.msra.mxu0 %v502
      %523 = vmatprep.subr.mxu0 0.0
      %524 = vmatpush1.msra.mxu0 %v503
      %525 = vmatprep.subr.mxu0 0.0
      %526 = vmatpush1.msra.mxu0 %v504
      %527 = vmatprep.subr.mxu0 0.0
      %528 = vmatpush1.msra.mxu0 %v505
      %529 = vmatprep.subr.mxu0 0.0
      %530 = vmatpush1.msra.mxu0 %v506
      %531 = vmatprep.subr.mxu0 0.0
      %532 = vmatpush1.msra.mxu0 %v507
      %533 = vmatprep.subr.mxu0 0.0
      %534 = vmatpush1.msra.mxu0 %v508
      %535 = vmatprep.subr.mxu0 0.0
      %536 = vmatpush1.msra.mxu0 %v509
      %537 = vmatprep.subr.mxu0 0.0
      %538 = vmatpush1.msra.mxu0 %v510
      %539 = vmatprep.subr.mxu0 0.0
      %540 = vmatpush1.msra.mxu0 %v511
      %541 = vmatprep.subr.mxu0 0.0
      %542 = vmatpush1.msra.mxu0 %v512
      %543 = vmatprep.subr.mxu0 0.0
      %544 = vmatpush1.msra.mxu0 %v513
      %545 = vmatprep.subr.mxu0 0.0
      %546 = vmatpush1.msra.mxu0 %v514
      %547 = vmatprep.subr.mxu0 0.0
      %548 = vmatpush1.msra.mxu0 0.0
      %549 = vmatprep.subr.mxu0 0.0
      %550 = vmatpush1.msra.mxu0 0.0
      %551 = vmatprep.subr.mxu0 0.0
      %552 = vmatpush1.msra.mxu0 0.0
      %553 = vmatprep.subr.mxu0 0.0
      %554 = vmatpush1.msra.mxu0 0.0
      %555 = vmatprep.subr.mxu0 0.0
      %556 = vmatpush1.msra.mxu0 0.0
      %557 = vmatprep.subr.mxu0 0.0
      %558 = vmatpush1.msra.mxu0 0.0
      %559 = vmatprep.subr.mxu0 0.0
      %560 = vmatpush1.msra.mxu0 0.0
      %561 = vmatprep.subr.mxu0 0.0
      %562 = vmatpush1.msra.mxu0 0.0
      %563 = vmatprep.subr.mxu0 0.0
      %564 = vmatpush1.msra.mxu0 0.0
      %565 = vmatprep.subr.mxu0 0.0
      %566 = vmatpush1.msra.mxu0 0.0
      %567 = vmatprep.subr.mxu0 0.0
      %568 = vmatpush1.msra.mxu0 0.0
      %569 = vmatprep.subr.mxu0 0.0
      %570 = vmatpush1.msra.mxu0 0.0
      %571 = vmatprep.subr.mxu0 0.0
      %572 = vmatpush1.msra.mxu0 0.0
      %573 = vmatprep.subr.mxu0 0.0
      %574 = vmatpush1.msra.mxu0 0.0
      %575 = vmatprep.subr.mxu0 0.0
      %576 = vmatpush1.msra.mxu0 0.0
      %577 = vmatprep.subr.mxu0 0.0
      %578 = vmatpush1.msra.mxu0 0.0
      %579 = vmatprep.mubr.f32.mxu0 0.0
      %580 = vmatmul.mubr.f32.gmra.mrb[0].mxu0 %v491
      %v581 = vpop.f32.mrb[0].mxu0
      %v582 = vadd.f32 0.0, %v581
      %v583 = vpop.f32.mrb[0].mxu0
      %584 = vmatprep.mubr.f32.mxu0 0.0
      %585 = vmatmul.mubr.f32.gmra.mrb[0].mxu0 %v492
      %v586 = vpop.f32.mrb[0].mxu0
      %v587 = vadd.f32 0.0, %v586
      %v588 = vpop.f32.mrb[0].mxu0
      %589 = vmatprep.mubr.f32.mxu0 0.0
      %590 = vmatmul.mubr.f32.gmra.mrb[0].mxu0 %v493
      %v591 = vpop.f32.mrb[0].mxu0
      %v592 = vadd.f32 0.0, %v591
      %v593 = vpop.f32.mrb[0].mxu0
      %594 = vmatprep.mubr.f32.mxu0 0.0
      %595 = vmatmul.mubr.f32.gmra.mrb[0].mxu0 %v494
      %v596 = vpop.f32.mrb[0].mxu0
      %v597 = vadd.f32 0.0, %v596
      %v598 = vpop.f32.mrb[0].mxu0
      %599 = vmatprep.mubr.f32.mxu0 0.0
      %600 = vmatmul.mubr.f32.gmra.mrb[0].mxu0 %v495
      %v601 = vpop.f32.mrb[0].mxu0
      %v602 = vadd.f32 0.0, %v601
      %v603 = vpop.f32.mrb[0].mxu0
      %604 = vmatprep.mubr.f32.mxu0 0.0
      %605 = vmatmul.mubr.f32.gmra.mrb[0].mxu0 %v496
      %v606 = vpop.f32.mrb[0].mxu0
      %v607 = vadd.f32 0.0, %v606
      %v608 = vpop.f32.mrb[0].mxu0
      %609 = vmatprep.mubr.f32.mxu0 0.0
      %610 = vmatmul.mubr.f32.gmra.mrb[0].mxu0 %v497
      %v611 = vpop.f32.mrb[0].mxu0
      %v612 = vadd.f32 0.0, %v611
      %v613 = vpop.f32.mrb[0].mxu0
      %614 = vmatprep.mubr.f32.mxu0 0.0
      %615 = vmatmul.mubr.f32.gmra.mrb[0].mxu0 %v498
      %v616 = vpop.f32.mrb[0].mxu0
      %v617 = vadd.f32 0.0, %v616
      %v618 = vpop.f32.mrb[0].mxu0
      %619 = vdwg.mxu0
      %vm620 = vcmask 31744
      %v621 = vsel %vm620, %v582, -inf
      %622 = vmax.xlane.f32.xlu0 %v621
      %v623 = vpop.xlane.xlu0 %622
      %v624 = vsel %vm620, %v587, -inf
      %625 = vmax.xlane.f32.xlu0 %v624
      %v626 = vpop.xlane.xlu0 %625
      %v627 = vsel %vm620, %v592, -inf
      %628 = vmax.xlane.f32.xlu0 %v627
      %v629 = vpop.xlane.xlu0 %628
      %v630 = vsel %vm620, %v597, -inf
      %631 = vmax.xlane.f32.xlu0 %v630
      %v632 = vpop.xlane.xlu0 %631
      %v633 = vsel %vm620, %v602, -inf
      %634 = vmax.xlane.f32.xlu0 %v633
      %v635 = vpop.xlane.xlu0 %634
      %v636 = vsel %vm620, %v607, -inf
      %637 = vmax.xlane.f32.xlu0 %v636
      %v638 = vpop.xlane.xlu0 %637
      %v639 = vsel %vm620, %v612, -inf
      %640 = vmax.xlane.f32.xlu0 %v639
      %v641 = vpop.xlane.xlu0 %640
      %v642 = vsel %vm620, %v617, -inf
      %643 = vmax.xlane.f32.xlu0 %v642
      %v644 = vpop.xlane.xlu0 %643
      %v645 = vsub.f32 %v582, %v623
      %v646 = vsub.f32 %v587, %v626
      %v647 = vsub.f32 %v592, %v629
      %v648 = vsub.f32 %v597, %v632
      %v649 = vsub.f32 %v602, %v635
      %v650 = vsub.f32 %v607, %v638
      %v651 = vsub.f32 %v612, %v641
      %v652 = vsub.f32 %v617, %v644
      %v653 = vmul.f32 %v645, 1.442695
      %v654 = vpow.pop %v653
      %v655 = vmul.f32 %v646, 1.442695
      %v656 = vpow.pop %v655
      %v657 = vmul.f32 %v647, 1.442695
      %v658 = vpow.pop %v657
      %v659 = vmul.f32 %v648, 1.442695
      %v660 = vpow.pop %v659
      %v661 = vmul.f32 %v649, 1.442695
      %v662 = vpow.pop %v661
      %v663 = vmul.f32 %v650, 1.442695
      %v664 = vpow.pop %v663
      %v665 = vmul.f32 %v651, 1.442695
      %v666 = vpow.pop %v665
      %v667 = vmul.f32 %v652, 1.442695
      %v668 = vpow.pop %v667
      %v669 = vsel %vm620, %v654, 0.0
      %670 = vadd.xlane.f32.xlu0 %v669
      %v671 = vpop.xlane.xlu0 %670
      %v672 = vsel %vm620, %v656, 0.0
      %673 = vadd.xlane.f32.xlu0 %v672
      %v674 = vpop.xlane.xlu0 %673
      %v675 = vsel %vm620, %v658, 0.0
      %676 = vadd.xlane.f32.xlu0 %v675
      %v677 = vpop.xlane.xlu0 %676
      %v678 = vsel %vm620, %v660, 0.0
      %679 = vadd.xlane.f32.xlu0 %v678
      %v680 = vpop.xlane.xlu0 %679
      %v681 = vsel %vm620, %v662, 0.0
      %682 = vadd.xlane.f32.xlu0 %v681
      %v683 = vpop.xlane.xlu0 %682
      %v684 = vsel %vm620, %v664, 0.0
      %685 = vadd.xlane.f32.xlu0 %v684
      %v686 = vpop.xlane.xlu0 %685
      %v687 = vsel %vm620, %v666, 0.0
      %688 = vadd.xlane.f32.xlu0 %v687
      %v689 = vpop.xlane.xlu0 %688
      %v690 = vsel %vm620, %v668, 0.0
      %691 = vadd.xlane.f32.xlu0 %v690
      %v692 = vpop.xlane.xlu0 %691
      %v693 = vrcp.pop %v671
      %v694 = vmul.f32 %v654, %v693
      %v695 = vrcp.pop %v674
      %v696 = vmul.f32 %v656, %v695
      %v697 = vrcp.pop %v677
      %v698 = vmul.f32 %v658, %v697
      %v699 = vrcp.pop %v680
      %v700 = vmul.f32 %v660, %v699
      %v701 = vrcp.pop %v683
      %v702 = vmul.f32 %v662, %v701
      %v703 = vrcp.pop %v686
      %v704 = vmul.f32 %v664, %v703
      %v705 = vrcp.pop %v689
      %v706 = vmul.f32 %v666, %v705
      %v707 = vrcp.pop %v692
      %v708 = vmul.f32 %v668, %v707
      %v709 = vld [vmem:[%s5] sm:$0xf]
      %v711 = vsel %vm620, %v694, 0
      %v714 = vsel %vm620, %v696, 0
      %v717 = vsel %vm620, %v698, 0
      %v720 = vsel %vm620, %v700, 0
      %v723 = vsel %vm620, %v702, 0
      %v726 = vsel %vm620, %v704, 0
      %v729 = vsel %vm620, %v706, 0
      %v732 = vsel %vm620, %v708, 0
      %vm734 = vcmask 1043456
      %v736 = vsel %vm734, %v709, 0
      %738 = vmatprep.subr.mxu0 0.0
      %739 = vmatpush1.msra.mxu0 %v736
      %740 = vmatprep.subr.mxu0 0.0
      %741 = vmatpush1.msra.mxu0 0.0
      %742 = vmatprep.subr.mxu0 0.0
      %743 = vmatpush1.msra.mxu0 0.0
      %744 = vmatprep.subr.mxu0 0.0
      %745 = vmatpush1.msra.mxu0 0.0
      %746 = vmatprep.subr.mxu0 0.0
      %747 = vmatpush1.msra.mxu0 0.0
      %748 = vmatprep.subr.mxu0 0.0
      %749 = vmatpush1.msra.mxu0 0.0
      %750 = vmatprep.subr.mxu0 0.0
      %751 = vmatpush1.msra.mxu0 0.0
      %752 = vmatprep.subr.mxu0 0.0
      %753 = vmatpush1.msra.mxu0 0.0
      %754 = vmatprep.subr.mxu0 0.0
      %755 = vmatpush1.msra.mxu0 0.0
      %756 = vmatprep.subr.mxu0 0.0
      %757 = vmatpush1.msra.mxu0 0.0
      %758 = vmatprep.subr.mxu0 0.0
      %759 = vmatpush1.msra.mxu0 0.0
      %760 = vmatprep.subr.mxu0 0.0
      %761 = vmatpush1.msra.mxu0 0.0
      %762 = vmatprep.subr.mxu0 0.0
      %763 = vmatpush1.msra.mxu0 0.0
      %764 = vmatprep.subr.mxu0 0.0
      %765 = vmatpush1.msra.mxu0 0.0
      %766 = vmatprep.subr.mxu0 0.0
      %767 = vmatpush1.msra.mxu0 0.0
      %768 = vmatprep.subr.mxu0 0.0
      %769 = vmatpush1.msra.mxu0 0.0
      %770 = vmatprep.subr.mxu0 0.0
      %771 = vmatpush1.msra.mxu0 0.0
      %772 = vmatprep.subr.mxu0 0.0
      %773 = vmatpush1.msra.mxu0 0.0
      %774 = vmatprep.subr.mxu0 0.0
      %775 = vmatpush1.msra.mxu0 0.0
      %776 = vmatprep.subr.mxu0 0.0
      %777 = vmatpush1.msra.mxu0 0.0
      %778 = vmatprep.subr.mxu0 0.0
      %779 = vmatpush1.msra.mxu0 0.0
      %780 = vmatprep.subr.mxu0 0.0
      %781 = vmatpush1.msra.mxu0 0.0
      %782 = vmatprep.subr.mxu0 0.0
      %783 = vmatpush1.msra.mxu0 0.0
      %784 = vmatprep.subr.mxu0 0.0
      %785 = vmatpush1.msra.mxu0 0.0
      %786 = vmatprep.subr.mxu0 0.0
      %787 = vmatpush1.msra.mxu0 0.0
      %788 = vmatprep.subr.mxu0 0.0
      %789 = vmatpush1.msra.mxu0 0.0
      %790 = vmatprep.subr.mxu0 0.0
      %791 = vmatpush1.msra.mxu0 0.0
      %792 = vmatprep.subr.mxu0 0.0
      %793 = vmatpush1.msra.mxu0 0.0
      %794 = vmatprep.subr.mxu0 0.0
      %795 = vmatpush1.msra.mxu0 0.0
      %796 = vmatprep.subr.mxu0 0.0
      %797 = vmatpush1.msra.mxu0 0.0
      %798 = vmatprep.subr.mxu0 0.0
      %799 = vmatpush1.msra.mxu0 0.0
      %800 = vmatprep.subr.mxu0 0.0
      %801 = vmatpush1.msra.mxu0 0.0
      %802 = vmatprep.mubr.f32.mxu0 0.0
      %803 = vmatmul.mubr.f32.gmra.mrb[0].mxu0 %v711
      %v804 = vpop.f32.mrb[0].mxu0
      %v805 = vadd.f32 0.0, %v804
      %v806 = vpop.f32.mrb[0].mxu0
      %807 = vmatprep.mubr.f32.mxu0 0.0
      %808 = vmatmul.mubr.f32.gmra.mrb[0].mxu0 %v714
      %v809 = vpop.f32.mrb[0].mxu0
      %v810 = vadd.f32 0.0, %v809
      %v811 = vpop.f32.mrb[0].mxu0
      %812 = vmatprep.mubr.f32.mxu0 0.0
      %813 = vmatmul.mubr.f32.gmra.mrb[0].mxu0 %v717
      %v814 = vpop.f32.mrb[0].mxu0
      %v815 = vadd.f32 0.0, %v814
      %v816 = vpop.f32.mrb[0].mxu0
      %817 = vmatprep.mubr.f32.mxu0 0.0
      %818 = vmatmul.mubr.f32.gmra.mrb[0].mxu0 %v720
      %v819 = vpop.f32.mrb[0].mxu0
      %v820 = vadd.f32 0.0, %v819
      %v821 = vpop.f32.mrb[0].mxu0
      %822 = vmatprep.mubr.f32.mxu0 0.0
      %823 = vmatmul.mubr.f32.gmra.mrb[0].mxu0 %v723
      %v824 = vpop.f32.mrb[0].mxu0
      %v825 = vadd.f32 0.0, %v824
      %v826 = vpop.f32.mrb[0].mxu0
      %827 = vmatprep.mubr.f32.mxu0 0.0
      %828 = vmatmul.mubr.f32.gmra.mrb[0].mxu0 %v726
      %v829 = vpop.f32.mrb[0].mxu0
      %v830 = vadd.f32 0.0, %v829
      %v831 = vpop.f32.mrb[0].mxu0
      %832 = vmatprep.mubr.f32.mxu0 0.0
      %833 = vmatmul.mubr.f32.gmra.mrb[0].mxu0 %v729
      %v834 = vpop.f32.mrb[0].mxu0
      %v835 = vadd.f32 0.0, %v834
      %v836 = vpop.f32.mrb[0].mxu0
      %837 = vmatprep.mubr.f32.mxu0 0.0
      %838 = vmatmul.mubr.f32.gmra.mrb[0].mxu0 %v732
      %v839 = vpop.f32.mrb[0].mxu0
      %v840 = vadd.f32 0.0, %v839
      %v841 = vpop.f32.mrb[0].mxu0
      %842 = vdwg.mxu0
      %v843 = vmul.f32 %v805, %v362
      %v844 = vmul.f32 %v810, %v363
      %v845 = vmul.f32 %v815, %v364
      %v846 = vmul.f32 %v820, %v365
      %v847 = vmul.f32 %v825, %v366
      %v848 = vmul.f32 %v830, %v367
      %v849 = vmul.f32 %v835, %v368
      %v850 = vmul.f32 %v840, %v369
      %v851 = vld [vmem:[%s6] sm:$0xff]
      %v852 = vld [vmem:[%s6 + $0x8] sm:$0xff]
      %v853 = vld [vmem:[%s6 + $0x10] sm:$0xff]
      %v854 = vld [vmem:[%s6 + $0x18] sm:$0xff]
      %v855 = vld [vmem:[%s6 + $0x20] sm:$0xff]
      %v856 = vld [vmem:[%s6 + $0x28] sm:$0xff]
      %v857 = vld [vmem:[%s6 + $0x30] sm:$0xff]
      %v858 = vld [vmem:[%s6 + $0x38] sm:$0xff]
      %v859 = vld [vmem:[%s6 + $0x40] sm:$0xff]
      %v860 = vld [vmem:[%s6 + $0x48] sm:$0xff]
      %v861 = vld [vmem:[%s6 + $0x50] sm:$0xff]
      %v862 = vld [vmem:[%s6 + $0x58] sm:$0xff]
      %v863 = vld [vmem:[%s6 + $0x60] sm:$0xff]
      %v864 = vld [vmem:[%s6 + $0x68] sm:$0xff]
      %v865 = vld [vmem:[%s6 + $0x70] sm:$0xff]
      %v866 = vld [vmem:[%s6 + $0x78] sm:$0xff]
      %867 = vmatprep.subr.mxu0 0.0
      %868 = vmatpush1.msra.mxu0 %v851
      %869 = vmatprep.subr.mxu0 0.0
      %870 = vmatpush1.msra.mxu0 %v852
      %871 = vmatprep.subr.mxu0 0.0
      %872 = vmatpush1.msra.mxu0 %v853
      %873 = vmatprep.subr.mxu0 0.0
      %874 = vmatpush1.msra.mxu0 %v854
      %875 = vmatprep.subr.mxu0 0.0
      %876 = vmatpush1.msra.mxu0 %v855
      %877 = vmatprep.subr.mxu0 0.0
      %878 = vmatpush1.msra.mxu0 %v856
      %879 = vmatprep.subr.mxu0 0.0
      %880 = vmatpush1.msra.mxu0 %v857
      %881 = vmatprep.subr.mxu0 0.0
      %882 = vmatpush1.msra.mxu0 %v858
      %883 = vmatprep.subr.mxu0 0.0
      %884 = vmatpush1.msra.mxu0 %v859
      %885 = vmatprep.subr.mxu0 0.0
      %886 = vmatpush1.msra.mxu0 %v860
      %887 = vmatprep.subr.mxu0 0.0
      %888 = vmatpush1.msra.mxu0 %v861
      %889 = vmatprep.subr.mxu0 0.0
      %890 = vmatpush1.msra.mxu0 %v862
      %891 = vmatprep.subr.mxu0 0.0
      %892 = vmatpush1.msra.mxu0 %v863
      %893 = vmatprep.subr.mxu0 0.0
      %894 = vmatpush1.msra.mxu0 %v864
      %895 = vmatprep.subr.mxu0 0.0
      %896 = vmatpush1.msra.mxu0 %v865
      %897 = vmatprep.subr.mxu0 0.0
      %898 = vmatpush1.msra.mxu0 %v866
      %899 = vmatprep.subr.mxu0 0.0
      %900 = vmatpush1.msra.mxu0 0.0
      %901 = vmatprep.subr.mxu0 0.0
      %902 = vmatpush1.msra.mxu0 0.0
      %903 = vmatprep.subr.mxu0 0.0
      %904 = vmatpush1.msra.mxu0 0.0
      %905 = vmatprep.subr.mxu0 0.0
      %906 = vmatpush1.msra.mxu0 0.0
      %907 = vmatprep.subr.mxu0 0.0
      %908 = vmatpush1.msra.mxu0 0.0
      %909 = vmatprep.subr.mxu0 0.0
      %910 = vmatpush1.msra.mxu0 0.0
      %911 = vmatprep.subr.mxu0 0.0
      %912 = vmatpush1.msra.mxu0 0.0
      %913 = vmatprep.subr.mxu0 0.0
      %914 = vmatpush1.msra.mxu0 0.0
      %915 = vmatprep.subr.mxu0 0.0
      %916 = vmatpush1.msra.mxu0 0.0
      %917 = vmatprep.subr.mxu0 0.0
      %918 = vmatpush1.msra.mxu0 0.0
      %919 = vmatprep.subr.mxu0 0.0
      %920 = vmatpush1.msra.mxu0 0.0
      %921 = vmatprep.subr.mxu0 0.0
      %922 = vmatpush1.msra.mxu0 0.0
      %923 = vmatprep.subr.mxu0 0.0
      %924 = vmatpush1.msra.mxu0 0.0
      %925 = vmatprep.subr.mxu0 0.0
      %926 = vmatpush1.msra.mxu0 0.0
      %927 = vmatprep.subr.mxu0 0.0
      %928 = vmatpush1.msra.mxu0 0.0
      %929 = vmatprep.subr.mxu0 0.0
      %930 = vmatpush1.msra.mxu0 0.0
      %931 = vmatprep.mubr.f32.mxu0 0.0
      %932 = vmatmul.mubr.f32.gmra.mrb[0].mxu0 %v843
      %v933 = vpop.f32.mrb[0].mxu0
      %v934 = vadd.f32 0.0, %v933
      %v935 = vpop.f32.mrb[0].mxu0
      %936 = vmatprep.mubr.f32.mxu0 0.0
      %937 = vmatmul.mubr.f32.gmra.mrb[0].mxu0 %v844
      %v938 = vpop.f32.mrb[0].mxu0
      %v939 = vadd.f32 0.0, %v938
      %v940 = vpop.f32.mrb[0].mxu0
      %941 = vmatprep.mubr.f32.mxu0 0.0
      %942 = vmatmul.mubr.f32.gmra.mrb[0].mxu0 %v845
      %v943 = vpop.f32.mrb[0].mxu0
      %v944 = vadd.f32 0.0, %v943
      %v945 = vpop.f32.mrb[0].mxu0
      %946 = vmatprep.mubr.f32.mxu0 0.0
      %947 = vmatmul.mubr.f32.gmra.mrb[0].mxu0 %v846
      %v948 = vpop.f32.mrb[0].mxu0
      %v949 = vadd.f32 0.0, %v948
      %v950 = vpop.f32.mrb[0].mxu0
      %951 = vmatprep.mubr.f32.mxu0 0.0
      %952 = vmatmul.mubr.f32.gmra.mrb[0].mxu0 %v847
      %v953 = vpop.f32.mrb[0].mxu0
      %v954 = vadd.f32 0.0, %v953
      %v955 = vpop.f32.mrb[0].mxu0
      %956 = vmatprep.mubr.f32.mxu0 0.0
      %957 = vmatmul.mubr.f32.gmra.mrb[0].mxu0 %v848
      %v958 = vpop.f32.mrb[0].mxu0
      %v959 = vadd.f32 0.0, %v958
      %v960 = vpop.f32.mrb[0].mxu0
      %961 = vmatprep.mubr.f32.mxu0 0.0
      %962 = vmatmul.mubr.f32.gmra.mrb[0].mxu0 %v849
      %v963 = vpop.f32.mrb[0].mxu0
      %v964 = vadd.f32 0.0, %v963
      %v965 = vpop.f32.mrb[0].mxu0
      %966 = vmatprep.mubr.f32.mxu0 0.0
      %967 = vmatmul.mubr.f32.gmra.mrb[0].mxu0 %v850
      %v968 = vpop.f32.mrb[0].mxu0
      %v969 = vadd.f32 0.0, %v968
      %v970 = vpop.f32.mrb[0].mxu0
      %971 = vdwg.mxu0
      %972 = vst.msk [vmem:[%s337] sm:$0xff] %vm413, %v934
      %973 = vst.msk [vmem:[%s337 + $0x8] sm:$0xff] %vm413, %v939
      %974 = vst.msk [vmem:[%s337 + $0x10] sm:$0xff] %vm413, %v944
      %975 = vst.msk [vmem:[%s337 + $0x18] sm:$0xff] %vm413, %v949
      %976 = vst.msk [vmem:[%s337 + $0x20] sm:$0xff] %vm413, %v954
      %977 = vst.msk [vmem:[%s337 + $0x28] sm:$0xff] %vm413, %v959
      %978 = vst.msk [vmem:[%s337 + $0x30] sm:$0xff] %vm413, %v964
      %979 = vst.msk [vmem:[%s337 + $0x38] sm:$0xff] %vm413, %v969
      %980 = vst.msk [vmem:[%s343] sm:$0xff] %vm620, %v694
      %981 = vst.msk [vmem:[%s343 + $0x8] sm:$0xff] %vm620, %v696
      %982 = vst.msk [vmem:[%s343 + $0x10] sm:$0xff] %vm620, %v698
      %983 = vst.msk [vmem:[%s343 + $0x18] sm:$0xff] %vm620, %v700
      %984 = vst.msk [vmem:[%s343 + $0x20] sm:$0xff] %vm620, %v702
      %985 = vst.msk [vmem:[%s343 + $0x28] sm:$0xff] %vm620, %v704
      %986 = vst.msk [vmem:[%s343 + $0x30] sm:$0xff] %vm620, %v706
      %987 = vst.msk [vmem:[%s343 + $0x38] sm:$0xff] %vm620, %v708
      %s988 = smul.u32 8, %s20
      %p989 = scmp.lt.s32.totalorder %s988, 15
      %s990 = scalar_select %p989, %s988, 15
      %s991 = smul.addr %s990, 8
      %s992 = scalar_lea.vmem %s7, %s991
      %s993 = smul.u32 8, %s20
      %p994 = scmp.lt.s32.totalorder %s993, 15
      %s995 = scalar_select %p994, %s993, 15
      %s996 = smul.addr %s995, 8
      %s997 = scalar_lea.vmem %s8, %s996
      // Predicated region
      $region49: #{tpu_custom_call.1} parent=47 // pred_check
        %p998 = pneg %p195
      $region50: #{tpu_custom_call.1} parent=47 // pred_check_branch
        %1000 = sbr.rel (%p998) target = $region52
      $region51: #{tpu_custom_call.1} parent=47 // pred_region
        %s1001 = smul.u32 8, %s20
      $region52: #{tpu_custom_call.1} parent=47 // pred_fallthru
        _
      // Predicated region
      $region53: #{tpu_custom_call.1} parent=47 // pred_check
        %p1002 = pneg %p221
      $region54: #{tpu_custom_call.1} parent=47 // pred_check_branch
        %1004 = sbr.rel (%p1002) target = $region56
      $region55: #{tpu_custom_call.1} parent=47 // pred_region
        %s1005 = smul.u32 8, %s20
      $region56: #{tpu_custom_call.1} parent=47 // pred_fallthru
        _
    $region48: #{tpu_custom_call.1} parent=5 // pred_fallthru
      _
    %p1006 = scmp.le.s32.totalorder 2, %s15
    // Predicated region
    $region57: #{tpu_custom_call.1} parent=5 // pred_check
      %p1007 = pneg %p1006
    $region58: #{tpu_custom_call.1} parent=5 // pred_check_branch
      %1009 = sbr.rel (%p1007) target = $region60
    $region59: #{tpu_custom_call.1} parent=5 // pred_region
      %s1010 = ssub.s32 %s15, 2
      // Predicated region
      $region61: #{tpu_custom_call.1} parent=59 // pred_check
        %p1011 = pneg %p201
      $region62: #{tpu_custom_call.1} parent=59 // pred_check_branch
        %1013 = sbr.rel (%p1011) target = $region64
      $region63: #{tpu_custom_call.1} parent=59 // pred_region
        %s1014 = smul.u32 8, %s21
        %p1015 = scmp.lt.s32.totalorder %s1014, 15
        %s1016 = scalar_select %p1015, %s1014, 15
        %s1017 = smul.addr %s1016, 8
        %s1018 = scalar_lea.vmem %s7, %s1017
      $region64: #{tpu_custom_call.1} parent=59 // pred_fallthru
        _
      // Predicated region
      $region65: #{tpu_custom_call.1} parent=59 // pred_check
        %p1019 = pneg %p227
      $region66: #{tpu_custom_call.1} parent=59 // pred_check_branch
        %1021 = sbr.rel (%p1019) target = $region68
      $region67: #{tpu_custom_call.1} parent=59 // pred_region
        %s1022 = smul.u32 8, %s21
        %p1023 = scmp.lt.s32.totalorder %s1022, 15
        %s1024 = scalar_select %p1023, %s1022, 15
        %s1025 = smul.addr %s1024, 8
        %s1026 = scalar_lea.vmem %s8, %s1025
      $region68: #{tpu_custom_call.1} parent=59 // pred_fallthru
        _
    $region60: #{tpu_custom_call.1} parent=5 // pred_fallthru
      _
  $region6: #{tpu_custom_call.1} parent=0 // loop_footer
    %s19 = sadd.s32 1, %s15
  $region7: #{tpu_custom_call.1} parent=0 // loop_footer_branch
    %14 = sbr.rel target = $region3
  $region8: #{tpu_custom_call.1} parent=0 // loop_exit
    _

</llo_original>
